<compile_context>
chip_gen: v7x
topology: tpu7x:2x2x1
jax: 0.10.0
libtpu: 0.0.40
codegen_flags: <defaults>
</compile_context>

<pallas_src>
import numpy as np
import jax
import jax.numpy as jnp
from jax.experimental import pallas as pl
from jax.experimental.pallas import tpu as pltpu

IN_EPS = 1e-5                      # PyTorch InstanceNorm3d default
VMEM_LIMIT = 32 * 1024 * 1024      # explicit scoped-VMEM limit (safe on v5e/v6e/v7x)


# ---------------------------------------------------------------------------
# Generic row-tiled GEMM kernel:  Y[rows, N] = X[rows, K] @ M[K, N]
# Used three times to apply the per-axis trilinear interpolation matrices.
# ---------------------------------------------------------------------------
def _rowgemm_kernel(x_ref, m_ref, o_ref):
    o_ref[...] = jnp.dot(
        x_ref[...], m_ref[...], preferred_element_type=jnp.float32
    ).astype(o_ref.dtype)


def _row_matmul(x2, m, *, row_tile=1024):
    R, K = x2.shape
    K2, N = m.shape
    assert K2 == K
    rt = min(row_tile, R)
    grid_r = pl.cdiv(R, rt)        # ragged tail handled by masked writeback
    return pl.pallas_call(
        _rowgemm_kernel,
        out_shape=jax.ShapeDtypeStruct((R, N), x2.dtype),
        grid_spec=pltpu.PrefetchScalarGridSpec(
            num_scalar_prefetch=0,
            grid=(grid_r,),
            in_specs=[
                pl.BlockSpec((rt, K), lambda i: (i, 0)),
                pl.BlockSpec((K, N), lambda i: (0, 0)),
            ],
            out_specs=pl.BlockSpec((rt, N), lambda i: (i, 0)),
        ),
        compiler_params=pltpu.CompilerParams(
            dimension_semantics=("parallel",),
            vmem_limit_bytes=VMEM_LIMIT,
        ),
    )(x2, m)


# ---------------------------------------------------------------------------
# Trilinear 2x upsample (align_corners=True) as three interp-matrix GEMMs.
# ---------------------------------------------------------------------------
def _interp_matrix(n_in, n_out):
    """Dense (n_out, n_in) 1-D linear interp matrix, align_corners=True."""
    m = np.zeros((n_out, n_in), dtype=np.float32)
    if n_in == 1 or n_out == 1:
        m[:, 0] = 1.0
        return m
    scale = (n_in - 1) / (n_out - 1)
    for i in range(n_out):
        src = i * scale
        i0 = min(int(np.floor(src)), n_in - 1)
        i1 = min(i0 + 1, n_in - 1)
        f = src - i0
        m[i, i0] += 1.0 - f
        m[i, i1] += f
    return m


def _trilinear_upsample(x, md, mh, mw):
    """x: (B, C, D, H, W) -> (B, C, Do, Ho, Wo). md/mh/mw: (n_out, n_in)."""
    B, C, D, H, W = x.shape
    Do, Ho, Wo = md.shape[0], mh.shape[0], mw.shape[0]
    # contract W
    y = _row_matmul(x.reshape(B * C * D * H, W), mw.T)
    y = y.reshape(B, C, D, H, Wo)
    # contract H
    y = jnp.transpose(y, (0, 1, 2, 4, 3)).reshape(B * C * D * Wo, H)
    y = _row_matmul(y, mh.T).reshape(B, C, D, Wo, Ho)
    # contract D
    y = jnp.transpose(y, (0, 1, 3, 4, 2)).reshape(B * C * Wo * Ho, D)
    y = _row_matmul(y, md.T).reshape(B, C, Wo, Ho, Do)
    # back to (B, C, Do, Ho, Wo)
    return jnp.transpose(y, (0, 1, 4, 3, 2))


# ---------------------------------------------------------------------------
# Fused Conv3d(3x3x3, pad 1, bias) + InstanceNorm3d(affine) + ReLU kernel.
# One grid step per batch instance; InstanceNorm stats are exactly per
# (instance, channel) over all spatial positions S inside that step.
# ---------------------------------------------------------------------------
def _conv_in_relu_kernel(cols_ref, w_ref, b_ref, g_ref, bt_ref, o_ref):
    # cols_ref: (1, S, K)  w_ref: (K, Co)  b/g/bt: (1, Co)  o_ref: (1, S, Co)
    y = jnp.dot(cols_ref[0], w_ref[...], preferred_element_type=jnp.float32)
    y = y + b_ref[...]                                   # conv bias
    S = y.shape[0]
    inv_s = 1.0 / S
    # single-pass mean / variance (biased, as in InstanceNorm)
    s1 = jnp.sum(y, axis=0, keepdims=True)               # (1, Co)
    s2 = jnp.sum(y * y, axis=0, keepdims=True)           # (1, Co)
    mean = s1 * inv_s
    var = jnp.maximum(s2 * inv_s - mean * mean, 0.0)
    inv = jax.lax.rsqrt(var + IN_EPS)                    # EUP
    yn = (y - mean) * (inv * g_ref[...]) + bt_ref[...]
    o_ref[0] = jnp.maximum(yn, 0.0).astype(o_ref.dtype)  # ReLU fused


def _conv3_instnorm_relu(xu, weight, bias, gamma, beta):
    """xu: (B, Cin, D, H, W); weight: (Cout, Cin, 3, 3, 3) -> (B, Cout, D, H, W)."""
    B, Cin, D, H, W = xu.shape
    Cout = weight.shape[0]
    S = D * H * W
    K = Cin * 27

    # --- im2col packing (zero-FLOP layout plumbing in the wrapper) ---
    xp = jnp.pad(xu, ((0, 0), (0, 0), (1, 1), (1, 1), (1, 1)))
    taps = []
    for kd in range(3):
        for kh in range(3):
            for kw in range(3):
                taps.append(xp[:, :, kd:kd + D, kh:kh + H, kw:kw + W])
    cols = jnp.stack(taps, axis=2)                       # (B, Cin, 27, D, H, W)
    cols = jnp.transpose(cols, (0, 3, 4, 5, 1, 2))       # (B, D, H, W, Cin, 27)
    cols = cols.reshape(B, S, K)
    w2 = jnp.transpose(weight, (1, 2, 3, 4, 0)).reshape(K, Cout)

    out = pl.pallas_call(
        _conv_in_relu_kernel,
        out_shape=jax.ShapeDtypeStruct((B, S, Cout), xu.dtype),
        grid_spec=pltpu.PrefetchScalarGridSpec(
            num_scalar_prefetch=0,
            grid=(B,),
            in_specs=[
                pl.BlockSpec((1, S, K), lambda b: (b, 0, 0)),
                pl.BlockSpec((K, Cout), lambda b: (0, 0)),
                pl.BlockSpec((1, Cout), lambda b: (0, 0)),
                pl.BlockSpec((1, Cout), lambda b: (0, 0)),
                pl.BlockSpec((1, Cout), lambda b: (0, 0)),
            ],
            out_specs=pl.BlockSpec((1, S, Cout), lambda b: (b, 0, 0)),
        ),
        compiler_params=pltpu.CompilerParams(
            dimension_semantics=("parallel",),
            vmem_limit_bytes=VMEM_LIMIT,
        ),
        cost_estimate=pl.CostEstimate(
            flops=2 * B * S * K * Cout,
            transcendentals=B * Cout,
            bytes_accessed=4 * (B * S * K + K * Cout + B * S * Cout + 3 * Cout),
        ),
    )(cols, w2, bias.reshape(1, Cout), gamma.reshape(1, Cout), beta.reshape(1, Cout))

    out = out.reshape(B, D, H, W, Cout)
    return jnp.transpose(out, (0, 4, 1, 2, 3))           # (B, Cout, D, H, W)


# ---------------------------------------------------------------------------
# Full UpConv forward.
# ---------------------------------------------------------------------------
def upconv_forward(x, weight, bias, gamma, beta, *, scale_factor=2):
    B, Cin, D, H, W = x.shape
    md = jnp.asarray(_interp_matrix(D, D * scale_factor))
    mh = jnp.asarray(_interp_matrix(H, H * scale_factor))
    mw = jnp.asarray(_interp_matrix(W, W * scale_factor))
    xu = _trilinear_upsample(x, md, mh, mw)
    return _conv3_instnorm_relu(xu, weight, bias, gamma, beta)


# ---------------------------------------------------------------------------
# Pure-JAX reference (independent compute path: einsum interp + XLA conv).
# ---------------------------------------------------------------------------
def _reference(x, weight, bias, gamma, beta, *, scale_factor=2):
    B, Cin, D, H, W = x.shape
    md = jnp.asarray(_interp_matrix(D, D * scale_factor))
    mh = jnp.asarray(_interp_matrix(H, H * scale_factor))
    mw = jnp.asarray(_interp_matrix(W, W * scale_factor))
    xu = jnp.einsum('bcdhw,Dd,Hh,Ww->bcDHW', x, md, mh, mw)
    y = jax.lax.conv_general_dilated(
        xu, weight, window_strides=(1, 1, 1),
        padding=((1, 1), (1, 1), (1, 1)),
        dimension_numbers=('NCDHW', 'OIDHW', 'NCDHW'))
    y = y + bias.reshape(1, -1, 1, 1, 1)
    mean = jnp.mean(y, axis=(2, 3, 4), keepdims=True)
    var = jnp.mean((y - mean) ** 2, axis=(2, 3, 4), keepdims=True)
    yn = (y - mean) * jax.lax.rsqrt(var + IN_EPS)
    yn = yn * gamma.reshape(1, -1, 1, 1, 1) + beta.reshape(1, -1, 1, 1, 1)
    return jnp.maximum(yn, 0.0)


if __name__ == "__main__":
    key = jax.random.PRNGKey(0)
    k_x, k_w, k_b, k_g, k_bt = jax.random.split(key, 5)

    B, Cin, D, H, W = 2, 4, 8, 8, 8
    Cout = 8
    x = jax.random.normal(k_x, (B, Cin, D, H, W), dtype=jnp.float32)

    fan_in = Cin * 27
    bound = float(1.0 / np.sqrt(fan_in))
    weight = jax.random.uniform(k_w, (Cout, Cin, 3, 3, 3), jnp.float32, -bound, bound)
    bias = jax.random.uniform(k_b, (Cout,), jnp.float32, -bound, bound)
    gamma = 1.0 + 0.1 * jax.random.normal(k_g, (Cout,), jnp.float32)
    beta = 0.1 * jax.random.normal(k_bt, (Cout,), jnp.float32)

    out = upconv_forward(x, weight, bias, gamma, beta, scale_factor=2)
    out = jax.block_until_ready(out)

    ref = _reference(x, weight, bias, gamma, beta, scale_factor=2)
    assert out.shape == (B, Cout, 2 * D, 2 * H, 2 * W)
    assert jnp.allclose(out, ref, atol=5e-4, rtol=5e-4)
    print("KERNEL_OK")
</pallas_src>

<mosaic_0001>
module attributes {stable_mosaic.version = 11 : i64} {
  func.func @_rowgemm_kernel(%arg0: i32, %arg1: memref<512x8xf32, #tpu.memory_space<vmem>>, %arg2: memref<8x16xf32, #tpu.memory_space<vmem>>, %arg3: memref<512x16xf32, #tpu.memory_space<vmem>>) attributes {dimension_semantics = [#tpu.dimension_semantics<parallel>], iteration_bounds = array<i64: 1>, scalar_prefetch = 0 : i64, scratch_operands = 0 : i64, tpu.core_type = #tpu.core_type<tc>, window_params = [{transform_indices = @transform_0, window_bounds = array<i64: 512, 8>}, {pipeline_mode = #tpu.pipeline_mode<synchronous>, transform_indices = @transform_1, window_bounds = array<i64: 8, 16>}, {transform_indices = @transform_2, window_bounds = array<i64: 512, 16>}]} {
    %c0 = arith.constant 0 : index
    %c0_0 = arith.constant 0 : index
    %0 = vector.load %arg1[%c0, %c0_0] : memref<512x8xf32, #tpu.memory_space<vmem>>, vector<512x8xf32>
    %c0_1 = arith.constant 0 : index
    %c0_2 = arith.constant 0 : index
    %1 = vector.load %arg2[%c0_1, %c0_2] : memref<8x16xf32, #tpu.memory_space<vmem>>, vector<8x16xf32>
    %cst = arith.constant dense<0.000000e+00> : vector<512x16xf32>
    %2 = tpu.matmul %0, %1, %cst {dimension_numbers = #tpu.dot_dimension_numbers<[1], [0], [0], [1], [0, 0, 1, 1], [], []>} : vector<512x8xf32>, vector<8x16xf32>, vector<512x16xf32> -> vector<512x16xf32>
    %c0_3 = arith.constant 0 : index
    %c0_4 = arith.constant 0 : index
    %3 = vector.load %arg3[%c0_3, %c0_4] : memref<512x16xf32, #tpu.memory_space<vmem>>, vector<512x16xf32>
    tpu.vector_store %arg3[%c0_3, %c0_4], %2 {strides = array<i32>} : memref<512x16xf32, #tpu.memory_space<vmem>>, vector<512x16xf32>,
    return
  }
  func.func @transform_0(%arg0: i32) -> (i32, i32) {
    %c0_i32 = arith.constant 0 : i32
    %c0_i32_0 = arith.constant 0 : i32
    return %arg0, %c0_i32 : i32, i32
  }
  func.func @transform_1(%arg0: i32) -> (i32, i32) {
    %c0_i32 = arith.constant 0 : i32
    %c0_i32_0 = arith.constant 0 : i32
    %c0_i32_1 = arith.constant 0 : i32
    return %c0_i32, %c0_i32_0 : i32, i32
  }
  func.func @transform_2(%arg0: i32) -> (i32, i32) {
    %c0_i32 = arith.constant 0 : i32
    %c0_i32_0 = arith.constant 0 : i32
    return %arg0, %c0_i32 : i32, i32
  }
}

</mosaic_0001>

<llo_original>
// kernel: tpu_custom_call.1
$region0: #{tpu_custom_call.1}
  #allocation0 [shape = 'u32[]', space=smem, size = 0x4, offset = 0x4, fixed_abs, tag = 'smem constant byte address 0x4 - core index']
  #allocation1 [shape = 'u32[144,128]{1,0:T(1,128)}', space=vmem, size = 0x12000, scoped, tag = 'internal scratch']
  %s0 = inlined_call_operand.vmem [shape: f32[512,8], index: 0, kind: input, shape index: {}]
  %s1 = inlined_call_operand.vmem [shape: f32[8,16], index: 1, kind: input, shape index: {}]
  %s2 = inlined_call_operand.vmem [shape: f32[512,16], index: 2, kind: output, shape index: {}]
  %s3 = sld [smem:[#allocation0]]
  $region18: #{tpu_custom_call.1} parent=0
    _
  %s5 = ssub.s32 1, %s3
  %s6 = scalar_select 0, %s5, %s3
  // Predicated region
  $region2: #{tpu_custom_call.1} parent=0 // pred_check
    _
  $region3: #{tpu_custom_call.1} parent=0 // pred_check_branch
    %8 = sbr.rel (0) target = $region5
  $region4: #{tpu_custom_call.1} parent=0 // pred_region
    _
  $region5: #{tpu_custom_call.1} parent=0 // pred_fallthru
    _
  // Predicated region
  $region6: #{tpu_custom_call.1} parent=0 // pred_check
    _
  $region7: #{tpu_custom_call.1} parent=0 // pred_check_branch
    %10 = sbr.rel (0) target = $region9
  $region8: #{tpu_custom_call.1} parent=0 // pred_region
    _
  $region9: #{tpu_custom_call.1} parent=0 // pred_fallthru
    _
  %v11 = vld [vmem:[%s0] sm:$0xff]
  %v12 = vld [vmem:[%s0 + $0x8] sm:$0xff]
  %v13 = vld [vmem:[%s0 + $0x10] sm:$0xff]
  %v14 = vld [vmem:[%s0 + $0x18] sm:$0xff]
  %v15 = vld [vmem:[%s0 + $0x20] sm:$0xff]
  %v16 = vld [vmem:[%s0 + $0x28] sm:$0xff]
  %v17 = vld [vmem:[%s0 + $0x30] sm:$0xff]
  %v18 = vld [vmem:[%s0 + $0x38] sm:$0xff]
  %v19 = vld [vmem:[%s0 + $0x40] sm:$0xff]
  %v20 = vld [vmem:[%s0 + $0x48] sm:$0xff]
  %v21 = vld [vmem:[%s0 + $0x50] sm:$0xff]
  %v22 = vld [vmem:[%s0 + $0x58] sm:$0xff]
  %v23 = vld [vmem:[%s0 + $0x60] sm:$0xff]
  %v24 = vld [vmem:[%s0 + $0x68] sm:$0xff]
  %v25 = vld [vmem:[%s0 + $0x70] sm:$0xff]
  %v26 = vld [vmem:[%s0 + $0x78] sm:$0xff]
  %v27 = vld [vmem:[%s0 + $0x80] sm:$0xff]
  %v28 = vld [vmem:[%s0 + $0x88] sm:$0xff]
  %v29 = vld [vmem:[%s0 + $0x90] sm:$0xff]
  %v30 = vld [vmem:[%s0 + $0x98] sm:$0xff]
  %v31 = vld [vmem:[%s0 + $0xa0] sm:$0xff]
  %v32 = vld [vmem:[%s0 + $0xa8] sm:$0xff]
  %v33 = vld [vmem:[%s0 + $0xb0] sm:$0xff]
  %v34 = vld [vmem:[%s0 + $0xb8] sm:$0xff]
  %v35 = vld [vmem:[%s0 + $0xc0] sm:$0xff]
  %v36 = vld [vmem:[%s0 + $0xc8] sm:$0xff]
  %v37 = vld [vmem:[%s0 + $0xd0] sm:$0xff]
  %v38 = vld [vmem:[%s0 + $0xd8] sm:$0xff]
  %v39 = vld [vmem:[%s0 + $0xe0] sm:$0xff]
  %v40 = vld [vmem:[%s0 + $0xe8] sm:$0xff]
  %v41 = vld [vmem:[%s0 + $0xf0] sm:$0xff]
  %v42 = vld [vmem:[%s0 + $0xf8] sm:$0xff]
  %v43 = vld [vmem:[%s0 + $0x100] sm:$0xff]
  %v44 = vld [vmem:[%s0 + $0x108] sm:$0xff]
  %v45 = vld [vmem:[%s0 + $0x110] sm:$0xff]
  %v46 = vld [vmem:[%s0 + $0x118] sm:$0xff]
  %v47 = vld [vmem:[%s0 + $0x120] sm:$0xff]
  %v48 = vld [vmem:[%s0 + $0x128] sm:$0xff]
  %v49 = vld [vmem:[%s0 + $0x130] sm:$0xff]
  %v50 = vld [vmem:[%s0 + $0x138] sm:$0xff]
  %v51 = vld [vmem:[%s0 + $0x140] sm:$0xff]
  %v52 = vld [vmem:[%s0 + $0x148] sm:$0xff]
  %v53 = vld [vmem:[%s0 + $0x150] sm:$0xff]
  %v54 = vld [vmem:[%s0 + $0x158] sm:$0xff]
  %v55 = vld [vmem:[%s0 + $0x160] sm:$0xff]
  %v56 = vld [vmem:[%s0 + $0x168] sm:$0xff]
  %v57 = vld [vmem:[%s0 + $0x170] sm:$0xff]
  %v58 = vld [vmem:[%s0 + $0x178] sm:$0xff]
  %v59 = vld [vmem:[%s0 + $0x180] sm:$0xff]
  %v60 = vld [vmem:[%s0 + $0x188] sm:$0xff]
  %v61 = vld [vmem:[%s0 + $0x190] sm:$0xff]
  %v62 = vld [vmem:[%s0 + $0x198] sm:$0xff]
  %v63 = vld [vmem:[%s0 + $0x1a0] sm:$0xff]
  %v64 = vld [vmem:[%s0 + $0x1a8] sm:$0xff]
  %v65 = vld [vmem:[%s0 + $0x1b0] sm:$0xff]
  %v66 = vld [vmem:[%s0 + $0x1b8] sm:$0xff]
  %v67 = vld [vmem:[%s0 + $0x1c0] sm:$0xff]
  %v68 = vld [vmem:[%s0 + $0x1c8] sm:$0xff]
  %v69 = vld [vmem:[%s0 + $0x1d0] sm:$0xff]
  %v70 = vld [vmem:[%s0 + $0x1d8] sm:$0xff]
  %v71 = vld [vmem:[%s0 + $0x1e0] sm:$0xff]
  %v72 = vld [vmem:[%s0 + $0x1e8] sm:$0xff]
  %v73 = vld [vmem:[%s0 + $0x1f0] sm:$0xff]
  %v74 = vld [vmem:[%s0 + $0x1f8] sm:$0xff]
  %v75 = vld [vmem:[%s1] sm:$0xff]
  %vm76 = vcmask 64512
  %v78 = vsel %vm76, %v11, 0
  %v81 = vsel %vm76, %v12, 0
  %v84 = vsel %vm76, %v13, 0
  %v87 = vsel %vm76, %v14, 0
  %v90 = vsel %vm76, %v15, 0
  %v93 = vsel %vm76, %v16, 0
  %v96 = vsel %vm76, %v17, 0
  %v99 = vsel %vm76, %v18, 0
  %v102 = vsel %vm76, %v19, 0
  %v105 = vsel %vm76, %v20, 0
  %v108 = vsel %vm76, %v21, 0
  %v111 = vsel %vm76, %v22, 0
  %v114 = vsel %vm76, %v23, 0
  %v117 = vsel %vm76, %v24, 0
  %v120 = vsel %vm76, %v25, 0
  %v123 = vsel %vm76, %v26, 0
  %v126 = vsel %vm76, %v27, 0
  %v129 = vsel %vm76, %v28, 0
  %v132 = vsel %vm76, %v29, 0
  %v135 = vsel %vm76, %v30, 0
  %v138 = vsel %vm76, %v31, 0
  %v141 = vsel %vm76, %v32, 0
  %v144 = vsel %vm76, %v33, 0
  %v147 = vsel %vm76, %v34, 0
  %v150 = vsel %vm76, %v35, 0
  %v153 = vsel %vm76, %v36, 0
  %v156 = vsel %vm76, %v37, 0
  %v159 = vsel %vm76, %v38, 0
  %v162 = vsel %vm76, %v39, 0
  %v165 = vsel %vm76, %v40, 0
  %v168 = vsel %vm76, %v41, 0
  %v171 = vsel %vm76, %v42, 0
  %v174 = vsel %vm76, %v43, 0
  %v177 = vsel %vm76, %v44, 0
  %v180 = vsel %vm76, %v45, 0
  %v183 = vsel %vm76, %v46, 0
  %v186 = vsel %vm76, %v47, 0
  %v189 = vsel %vm76, %v48, 0
  %v192 = vsel %vm76, %v49, 0
  %v195 = vsel %vm76, %v50, 0
  %v198 = vsel %vm76, %v51, 0
  %v201 = vsel %vm76, %v52, 0
  %v204 = vsel %vm76, %v53, 0
  %v207 = vsel %vm76, %v54, 0
  %v210 = vsel %vm76, %v55, 0
  %v213 = vsel %vm76, %v56, 0
  %v216 = vsel %vm76, %v57, 0
  %v219 = vsel %vm76, %v58, 0
  %v222 = vsel %vm76, %v59, 0
  %v225 = vsel %vm76, %v60, 0
  %v228 = vsel %vm76, %v61, 0
  %v231 = vsel %vm76, %v62, 0
  %v234 = vsel %vm76, %v63, 0
  %v237 = vsel %vm76, %v64, 0
  %v240 = vsel %vm76, %v65, 0
  %v243 = vsel %vm76, %v66, 0
  %v246 = vsel %vm76, %v67, 0
  %v249 = vsel %vm76, %v68, 0
  %v252 = vsel %vm76, %v69, 0
  %v255 = vsel %vm76, %v70, 0
  %v258 = vsel %vm76, %v71, 0
  %v261 = vsel %vm76, %v72, 0
  %v264 = vsel %vm76, %v73, 0
  %v267 = vsel %vm76, %v74, 0
  %269 = vmatprep.subr.mxu0 0.0
  %270 = vmatpush1.msra.mxu0 %v75
  %271 = vmatprep.subr.mxu0 0.0
  %272 = vmatpush1.msra.mxu0 0.0
  %273 = vmatprep.subr.mxu0 0.0
  %274 = vmatpush1.msra.mxu0 0.0
  %275 = vmatprep.subr.mxu0 0.0
  %276 = vmatpush1.msra.mxu0 0.0
  %277 = vmatprep.subr.mxu0 0.0
  %278 = vmatpush1.msra.mxu0 0.0
  %279 = vmatprep.subr.mxu0 0.0
  %280 = vmatpush1.msra.mxu0 0.0
  %281 = vmatprep.subr.mxu0 0.0
  %282 = vmatpush1.msra.mxu0 0.0
  %283 = vmatprep.subr.mxu0 0.0
  %284 = vmatpush1.msra.mxu0 0.0
  %285 = vmatprep.subr.mxu0 0.0
  %286 = vmatpush1.msra.mxu0 0.0
  %287 = vmatprep.subr.mxu0 0.0
  %288 = vmatpush1.msra.mxu0 0.0
  %289 = vmatprep.subr.mxu0 0.0
  %290 = vmatpush1.msra.mxu0 0.0
  %291 = vmatprep.subr.mxu0 0.0
  %292 = vmatpush1.msra.mxu0 0.0
  %293 = vmatprep.subr.mxu0 0.0
  %294 = vmatpush1.msra.mxu0 0.0
  %295 = vmatprep.subr.mxu0 0.0
  %296 = vmatpush1.msra.mxu0 0.0
  %297 = vmatprep.subr.mxu0 0.0
  %298 = vmatpush1.msra.mxu0 0.0
  %299 = vmatprep.subr.mxu0 0.0
  %300 = vmatpush1.msra.mxu0 0.0
  %301 = vmatprep.subr.mxu0 0.0
  %302 = vmatpush1.msra.mxu0 0.0
  %303 = vmatprep.subr.mxu0 0.0
  %304 = vmatpush1.msra.mxu0 0.0
  %305 = vmatprep.subr.mxu0 0.0
  %306 = vmatpush1.msra.mxu0 0.0
  %307 = vmatprep.subr.mxu0 0.0
  %308 = vmatpush1.msra.mxu0 0.0
  %309 = vmatprep.subr.mxu0 0.0
  %310 = vmatpush1.msra.mxu0 0.0
  %311 = vmatprep.subr.mxu0 0.0
  %312 = vmatpush1.msra.mxu0 0.0
  %313 = vmatprep.subr.mxu0 0.0
  %314 = vmatpush1.msra.mxu0 0.0
  %315 = vmatprep.subr.mxu0 0.0
  %316 = vmatpush1.msra.mxu0 0.0
  %317 = vmatprep.subr.mxu0 0.0
  %318 = vmatpush1.msra.mxu0 0.0
  %319 = vmatprep.subr.mxu0 0.0
  %320 = vmatpush1.msra.mxu0 0.0
  %321 = vmatprep.subr.mxu0 0.0
  %322 = vmatpush1.msra.mxu0 0.0
  %323 = vmatprep.subr.mxu0 0.0
  %324 = vmatpush1.msra.mxu0 0.0
  %325 = vmatprep.subr.mxu0 0.0
  %326 = vmatpush1.msra.mxu0 0.0
  %327 = vmatprep.subr.mxu0 0.0
  %328 = vmatpush1.msra.mxu0 0.0
  %329 = vmatprep.subr.mxu0 0.0
  %330 = vmatpush1.msra.mxu0 0.0
  %331 = vmatprep.subr.mxu0 0.0
  %332 = vmatpush1.msra.mxu0 0.0
  %333 = vmatprep.mubr.f32.mxu0 0.0
  %334 = vmatmul.mubr.f32.gmra.mrb[0].mxu0 %v78
  %v335 = vpop.f32.mrb[0].mxu0
  %v336 = vadd.f32 0.0, %v335
  %v337 = vpop.f32.mrb[0].mxu0
  %338 = vmatprep.mubr.f32.mxu0 0.0
  %339 = vmatmul.mubr.f32.gmra.mrb[0].mxu0 %v81
  %v340 = vpop.f32.mrb[0].mxu0
  %v341 = vadd.f32 0.0, %v340
  %v342 = vpop.f32.mrb[0].mxu0
  %343 = vmatprep.mubr.f32.mxu0 0.0
  %344 = vmatmul.mubr.f32.gmra.mrb[0].mxu0 %v84
  %v345 = vpop.f32.mrb[0].mxu0
  %v346 = vadd.f32 0.0, %v345
  %v347 = vpop.f32.mrb[0].mxu0
  %348 = vmatprep.mubr.f32.mxu0 0.0
  %349 = vmatmul.mubr.f32.gmra.mrb[0].mxu0 %v87
  %v350 = vpop.f32.mrb[0].mxu0
  %v351 = vadd.f32 0.0, %v350
  %v352 = vpop.f32.mrb[0].mxu0
  %353 = vmatprep.mubr.f32.mxu0 0.0
  %354 = vmatmul.mubr.f32.gmra.mrb[0].mxu0 %v90
  %v355 = vpop.f32.mrb[0].mxu0
  %v356 = vadd.f32 0.0, %v355
  %v357 = vpop.f32.mrb[0].mxu0
  %358 = vmatprep.mubr.f32.mxu0 0.0
  %359 = vmatmul.mubr.f32.gmra.mrb[0].mxu0 %v93
  %v360 = vpop.f32.mrb[0].mxu0
  %v361 = vadd.f32 0.0, %v360
  %v362 = vpop.f32.mrb[0].mxu0
  %363 = vmatprep.mubr.f32.mxu0 0.0
  %364 = vmatmul.mubr.f32.gmra.mrb[0].mxu0 %v96
  %v365 = vpop.f32.mrb[0].mxu0
  %v366 = vadd.f32 0.0, %v365
  %v367 = vpop.f32.mrb[0].mxu0
  %368 = vmatprep.mubr.f32.mxu0 0.0
  %369 = vmatmul.mubr.f32.gmra.mrb[0].mxu0 %v99
  %v370 = vpop.f32.mrb[0].mxu0
  %v371 = vadd.f32 0.0, %v370
  %v372 = vpop.f32.mrb[0].mxu0
  %373 = vmatprep.mubr.f32.mxu0 0.0
  %374 = vmatmul.mubr.f32.gmra.mrb[0].mxu0 %v102
  %v375 = vpop.f32.mrb[0].mxu0
  %v376 = vadd.f32 0.0, %v375
  %v377 = vpop.f32.mrb[0].mxu0
  %378 = vmatprep.mubr.f32.mxu0 0.0
  %379 = vmatmul.mubr.f32.gmra.mrb[0].mxu0 %v105
  %v380 = vpop.f32.mrb[0].mxu0
  %v381 = vadd.f32 0.0, %v380
  %v382 = vpop.f32.mrb[0].mxu0
  %383 = vmatprep.mubr.f32.mxu0 0.0
  %384 = vmatmul.mubr.f32.gmra.mrb[0].mxu0 %v108
  %v385 = vpop.f32.mrb[0].mxu0
  %v386 = vadd.f32 0.0, %v385
  %v387 = vpop.f32.mrb[0].mxu0
  %388 = vmatprep.mubr.f32.mxu0 0.0
  %389 = vmatmul.mubr.f32.gmra.mrb[0].mxu0 %v111
  %v390 = vpop.f32.mrb[0].mxu0
  %v391 = vadd.f32 0.0, %v390
  %v392 = vpop.f32.mrb[0].mxu0
  %393 = vmatprep.mubr.f32.mxu0 0.0
  %394 = vmatmul.mubr.f32.gmra.mrb[0].mxu0 %v114
  %v395 = vpop.f32.mrb[0].mxu0
  %v396 = vadd.f32 0.0, %v395
  %v397 = vpop.f32.mrb[0].mxu0
  %398 = vmatprep.mubr.f32.mxu0 0.0
  %399 = vmatmul.mubr.f32.gmra.mrb[0].mxu0 %v117
  %v400 = vpop.f32.mrb[0].mxu0
  %v401 = vadd.f32 0.0, %v400
  %v402 = vpop.f32.mrb[0].mxu0
  %403 = vmatprep.mubr.f32.mxu0 0.0
  %404 = vmatmul.mubr.f32.gmra.mrb[0].mxu0 %v120
  %v405 = vpop.f32.mrb[0].mxu0
  %v406 = vadd.f32 0.0, %v405
  %v407 = vpop.f32.mrb[0].mxu0
  %408 = vmatprep.mubr.f32.mxu0 0.0
  %409 = vmatmul.mubr.f32.gmra.mrb[0].mxu0 %v123
  %v410 = vpop.f32.mrb[0].mxu0
  %v411 = vadd.f32 0.0, %v410
  %v412 = vpop.f32.mrb[0].mxu0
  %413 = vmatprep.mubr.f32.mxu0 0.0
  %414 = vmatmul.mubr.f32.gmra.mrb[0].mxu0 %v126
  %v415 = vpop.f32.mrb[0].mxu0
  %v416 = vadd.f32 0.0, %v415
  %v417 = vpop.f32.mrb[0].mxu0
  %418 = vmatprep.mubr.f32.mxu0 0.0
  %419 = vmatmul.mubr.f32.gmra.mrb[0].mxu0 %v129
  %v420 = vpop.f32.mrb[0].mxu0
  %v421 = vadd.f32 0.0, %v420
  %v422 = vpop.f32.mrb[0].mxu0
  %423 = vmatprep.mubr.f32.mxu0 0.0
  %424 = vmatmul.mubr.f32.gmra.mrb[0].mxu0 %v132
  %v425 = vpop.f32.mrb[0].mxu0
  %v426 = vadd.f32 0.0, %v425
  %v427 = vpop.f32.mrb[0].mxu0
  %428 = vmatprep.mubr.f32.mxu0 0.0
  %429 = vmatmul.mubr.f32.gmra.mrb[0].mxu0 %v135
  %v430 = vpop.f32.mrb[0].mxu0
  %v431 = vadd.f32 0.0, %v430
  %v432 = vpop.f32.mrb[0].mxu0
  %433 = vmatprep.mubr.f32.mxu0 0.0
  %434 = vmatmul.mubr.f32.gmra.mrb[0].mxu0 %v138
  %v435 = vpop.f32.mrb[0].mxu0
  %v436 = vadd.f32 0.0, %v435
  %v437 = vpop.f32.mrb[0].mxu0
  %438 = vmatprep.mubr.f32.mxu0 0.0
  %439 = vmatmul.mubr.f32.gmra.mrb[0].mxu0 %v141
  %v440 = vpop.f32.mrb[0].mxu0
  %v441 = vadd.f32 0.0, %v440
  %v442 = vpop.f32.mrb[0].mxu0
  %443 = vmatprep.mubr.f32.mxu0 0.0
  %444 = vmatmul.mubr.f32.gmra.mrb[0].mxu0 %v144
  %v445 = vpop.f32.mrb[0].mxu0
  %v446 = vadd.f32 0.0, %v445
  %v447 = vpop.f32.mrb[0].mxu0
  %448 = vmatprep.mubr.f32.mxu0 0.0
  %449 = vmatmul.mubr.f32.gmra.mrb[0].mxu0 %v147
  %v450 = vpop.f32.mrb[0].mxu0
  %v451 = vadd.f32 0.0, %v450
  %v452 = vpop.f32.mrb[0].mxu0
  %453 = vmatprep.mubr.f32.mxu0 0.0
  %454 = vmatmul.mubr.f32.gmra.mrb[0].mxu0 %v150
  %v455 = vpop.f32.mrb[0].mxu0
  %v456 = vadd.f32 0.0, %v455
  %v457 = vpop.f32.mrb[0].mxu0
  %458 = vmatprep.mubr.f32.mxu0 0.0
  %459 = vmatmul.mubr.f32.gmra.mrb[0].mxu0 %v153
  %v460 = vpop.f32.mrb[0].mxu0
  %v461 = vadd.f32 0.0, %v460
  %v462 = vpop.f32.mrb[0].mxu0
  %463 = vmatprep.mubr.f32.mxu0 0.0
  %464 = vmatmul.mubr.f32.gmra.mrb[0].mxu0 %v156
  %v465 = vpop.f32.mrb[0].mxu0
  %v466 = vadd.f32 0.0, %v465
  %v467 = vpop.f32.mrb[0].mxu0
  %468 = vmatprep.mubr.f32.mxu0 0.0
  %469 = vmatmul.mubr.f32.gmra.mrb[0].mxu0 %v159
  %v470 = vpop.f32.mrb[0].mxu0
  %v471 = vadd.f32 0.0, %v470
  %v472 = vpop.f32.mrb[0].mxu0
  %473 = vmatprep.mubr.f32.mxu0 0.0
  %474 = vmatmul.mubr.f32.gmra.mrb[0].mxu0 %v162
  %v475 = vpop.f32.mrb[0].mxu0
  %v476 = vadd.f32 0.0, %v475
  %v477 = vpop.f32.mrb[0].mxu0
  %478 = vmatprep.mubr.f32.mxu0 0.0
  %479 = vmatmul.mubr.f32.gmra.mrb[0].mxu0 %v165
  %v480 = vpop.f32.mrb[0].mxu0
  %v481 = vadd.f32 0.0, %v480
  %v482 = vpop.f32.mrb[0].mxu0
  %483 = vmatprep.mubr.f32.mxu0 0.0
  %484 = vmatmul.mubr.f32.gmra.mrb[0].mxu0 %v168
  %v485 = vpop.f32.mrb[0].mxu0
  %v486 = vadd.f32 0.0, %v485
  %v487 = vpop.f32.mrb[0].mxu0
  %488 = vmatprep.mubr.f32.mxu0 0.0
  %489 = vmatmul.mubr.f32.gmra.mrb[0].mxu0 %v171
  %v490 = vpop.f32.mrb[0].mxu0
  %v491 = vadd.f32 0.0, %v490
  %v492 = vpop.f32.mrb[0].mxu0
  %493 = vmatprep.mubr.f32.mxu0 0.0
  %494 = vmatmul.mubr.f32.gmra.mrb[0].mxu0 %v174
  %v495 = vpop.f32.mrb[0].mxu0
  %v496 = vadd.f32 0.0, %v495
  %v497 = vpop.f32.mrb[0].mxu0
  %498 = vmatprep.mubr.f32.mxu0 0.0
  %499 = vmatmul.mubr.f32.gmra.mrb[0].mxu0 %v177
  %v500 = vpop.f32.mrb[0].mxu0
  %v501 = vadd.f32 0.0, %v500
  %v502 = vpop.f32.mrb[0].mxu0
  %503 = vmatprep.mubr.f32.mxu0 0.0
  %504 = vmatmul.mubr.f32.gmra.mrb[0].mxu0 %v180
  %v505 = vpop.f32.mrb[0].mxu0
  %v506 = vadd.f32 0.0, %v505
  %v507 = vpop.f32.mrb[0].mxu0
  %508 = vmatprep.mubr.f32.mxu0 0.0
  %509 = vmatmul.mubr.f32.gmra.mrb[0].mxu0 %v183
  %v510 = vpop.f32.mrb[0].mxu0
  %v511 = vadd.f32 0.0, %v510
  %v512 = vpop.f32.mrb[0].mxu0
  %513 = vmatprep.mubr.f32.mxu0 0.0
  %514 = vmatmul.mubr.f32.gmra.mrb[0].mxu0 %v186
  %v515 = vpop.f32.mrb[0].mxu0
  %v516 = vadd.f32 0.0, %v515
  %v517 = vpop.f32.mrb[0].mxu0
  %518 = vmatprep.mubr.f32.mxu0 0.0
  %519 = vmatmul.mubr.f32.gmra.mrb[0].mxu0 %v189
  %v520 = vpop.f32.mrb[0].mxu0
  %v521 = vadd.f32 0.0, %v520
  %v522 = vpop.f32.mrb[0].mxu0
  %523 = vmatprep.mubr.f32.mxu0 0.0
  %524 = vmatmul.mubr.f32.gmra.mrb[0].mxu0 %v192
  %v525 = vpop.f32.mrb[0].mxu0
  %v526 = vadd.f32 0.0, %v525
  %v527 = vpop.f32.mrb[0].mxu0
  %528 = vmatprep.mubr.f32.mxu0 0.0
  %529 = vmatmul.mubr.f32.gmra.mrb[0].mxu0 %v195
  %v530 = vpop.f32.mrb[0].mxu0
  %v531 = vadd.f32 0.0, %v530
  %v532 = vpop.f32.mrb[0].mxu0
  %533 = vmatprep.mubr.f32.mxu0 0.0
  %534 = vmatmul.mubr.f32.gmra.mrb[0].mxu0 %v198
  %v535 = vpop.f32.mrb[0].mxu0
  %v536 = vadd.f32 0.0, %v535
  %v537 = vpop.f32.mrb[0].mxu0
  %538 = vmatprep.mubr.f32.mxu0 0.0
  %539 = vmatmul.mubr.f32.gmra.mrb[0].mxu0 %v201
  %v540 = vpop.f32.mrb[0].mxu0
  %v541 = vadd.f32 0.0, %v540
  %v542 = vpop.f32.mrb[0].mxu0
  %543 = vmatprep.mubr.f32.mxu0 0.0
  %544 = vmatmul.mubr.f32.gmra.mrb[0].mxu0 %v204
  %v545 = vpop.f32.mrb[0].mxu0
  %v546 = vadd.f32 0.0, %v545
  %v547 = vpop.f32.mrb[0].mxu0
  %548 = vmatprep.mubr.f32.mxu0 0.0
  %549 = vmatmul.mubr.f32.gmra.mrb[0].mxu0 %v207
  %v550 = vpop.f32.mrb[0].mxu0
  %v551 = vadd.f32 0.0, %v550
  %v552 = vpop.f32.mrb[0].mxu0
  %553 = vmatprep.mubr.f32.mxu0 0.0
  %554 = vmatmul.mubr.f32.gmra.mrb[0].mxu0 %v210
  %v555 = vpop.f32.mrb[0].mxu0
  %v556 = vadd.f32 0.0, %v555
  %v557 = vpop.f32.mrb[0].mxu0
  %558 = vmatprep.mubr.f32.mxu0 0.0
  %559 = vmatmul.mubr.f32.gmra.mrb[0].mxu0 %v213
  %v560 = vpop.f32.mrb[0].mxu0
  %v561 = vadd.f32 0.0, %v560
  %v562 = vpop.f32.mrb[0].mxu0
  %563 = vmatprep.mubr.f32.mxu0 0.0
  %564 = vmatmul.mubr.f32.gmra.mrb[0].mxu0 %v216
  %v565 = vpop.f32.mrb[0].mxu0
  %v566 = vadd.f32 0.0, %v565
  %v567 = vpop.f32.mrb[0].mxu0
  %568 = vmatprep.mubr.f32.mxu0 0.0
  %569 = vmatmul.mubr.f32.gmra.mrb[0].mxu0 %v219
  %v570 = vpop.f32.mrb[0].mxu0
  %v571 = vadd.f32 0.0, %v570
  %v572 = vpop.f32.mrb[0].mxu0
  %573 = vmatprep.mubr.f32.mxu0 0.0
  %574 = vmatmul.mubr.f32.gmra.mrb[0].mxu0 %v222
  %v575 = vpop.f32.mrb[0].mxu0
  %v576 = vadd.f32 0.0, %v575
  %v577 = vpop.f32.mrb[0].mxu0
  %578 = vmatprep.mubr.f32.mxu0 0.0
  %579 = vmatmul.mubr.f32.gmra.mrb[0].mxu0 %v225
  %v580 = vpop.f32.mrb[0].mxu0
  %v581 = vadd.f32 0.0, %v580
  %v582 = vpop.f32.mrb[0].mxu0
  %583 = vmatprep.mubr.f32.mxu0 0.0
  %584 = vmatmul.mubr.f32.gmra.mrb[0].mxu0 %v228
  %v585 = vpop.f32.mrb[0].mxu0
  %v586 = vadd.f32 0.0, %v585
  %v587 = vpop.f32.mrb[0].mxu0
  %588 = vmatprep.mubr.f32.mxu0 0.0
  %589 = vmatmul.mubr.f32.gmra.mrb[0].mxu0 %v231
  %v590 = vpop.f32.mrb[0].mxu0
  %v591 = vadd.f32 0.0, %v590
  %v592 = vpop.f32.mrb[0].mxu0
  %593 = vmatprep.mubr.f32.mxu0 0.0
  %594 = vmatmul.mubr.f32.gmra.mrb[0].mxu0 %v234
  %v595 = vpop.f32.mrb[0].mxu0
  %v596 = vadd.f32 0.0, %v595
  %v597 = vpop.f32.mrb[0].mxu0
  %598 = vmatprep.mubr.f32.mxu0 0.0
  %599 = vmatmul.mubr.f32.gmra.mrb[0].mxu0 %v237
  %v600 = vpop.f32.mrb[0].mxu0
  %v601 = vadd.f32 0.0, %v600
  %v602 = vpop.f32.mrb[0].mxu0
  %603 = vmatprep.mubr.f32.mxu0 0.0
  %604 = vmatmul.mubr.f32.gmra.mrb[0].mxu0 %v240
  %v605 = vpop.f32.mrb[0].mxu0
  %v606 = vadd.f32 0.0, %v605
  %v607 = vpop.f32.mrb[0].mxu0
  %608 = vmatprep.mubr.f32.mxu0 0.0
  %609 = vmatmul.mubr.f32.gmra.mrb[0].mxu0 %v243
  %v610 = vpop.f32.mrb[0].mxu0
  %v611 = vadd.f32 0.0, %v610
  %v612 = vpop.f32.mrb[0].mxu0
  %613 = vmatprep.mubr.f32.mxu0 0.0
  %614 = vmatmul.mubr.f32.gmra.mrb[0].mxu0 %v246
  %v615 = vpop.f32.mrb[0].mxu0
  %v616 = vadd.f32 0.0, %v615
  %v617 = vpop.f32.mrb[0].mxu0
  %618 = vmatprep.mubr.f32.mxu0 0.0
  %619 = vmatmul.mubr.f32.gmra.mrb[0].mxu0 %v249
  %v620 = vpop.f32.mrb[0].mxu0
  %v621 = vadd.f32 0.0, %v620
  %v622 = vpop.f32.mrb[0].mxu0
  %623 = vmatprep.mubr.f32.mxu0 0.0
  %624 = vmatmul.mubr.f32.gmra.mrb[0].mxu0 %v252
  %v625 = vpop.f32.mrb[0].mxu0
  %v626 = vadd.f32 0.0, %v625
  %v627 = vpop.f32.mrb[0].mxu0
  %628 = vmatprep.mubr.f32.mxu0 0.0
  %629 = vmatmul.mubr.f32.gmra.mrb[0].mxu0 %v255
  %v630 = vpop.f32.mrb[0].mxu0
  %v631 = vadd.f32 0.0, %v630
  %v632 = vpop.f32.mrb[0].mxu0
  %633 = vmatprep.mubr.f32.mxu0 0.0
  %634 = vmatmul.mubr.f32.gmra.mrb[0].mxu0 %v258
  %v635 = vpop.f32.mrb[0].mxu0
  %v636 = vadd.f32 0.0, %v635
  %v637 = vpop.f32.mrb[0].mxu0
  %638 = vmatprep.mubr.f32.mxu0 0.0
  %639 = vmatmul.mubr.f32.gmra.mrb[0].mxu0 %v261
  %v640 = vpop.f32.mrb[0].mxu0
  %v641 = vadd.f32 0.0, %v640
  %v642 = vpop.f32.mrb[0].mxu0
  %643 = vmatprep.mubr.f32.mxu0 0.0
  %644 = vmatmul.mubr.f32.gmra.mrb[0].mxu0 %v264
  %v645 = vpop.f32.mrb[0].mxu0
  %v646 = vadd.f32 0.0, %v645
  %v647 = vpop.f32.mrb[0].mxu0
  %648 = vmatprep.mubr.f32.mxu0 0.0
  %649 = vmatmul.mubr.f32.gmra.mrb[0].mxu0 %v267
  %v650 = vpop.f32.mrb[0].mxu0
  %v651 = vadd.f32 0.0, %v650
  %v652 = vpop.f32.mrb[0].mxu0
  %653 = vdwg.mxu0
  %vm654 = vcmask 130048
  %655 = vst.msk [vmem:[%s2] sm:$0xff] %vm654, %v336
  %656 = vst.msk [vmem:[%s2 + $0x8] sm:$0xff] %vm654, %v341
  %657 = vst.msk [vmem:[%s2 + $0x10] sm:$0xff] %vm654, %v346
  %658 = vst.msk [vmem:[%s2 + $0x18] sm:$0xff] %vm654, %v351
  %659 = vst.msk [vmem:[%s2 + $0x20] sm:$0xff] %vm654, %v356
  %660 = vst.msk [vmem:[%s2 + $0x28] sm:$0xff] %vm654, %v361
  %661 = vst.msk [vmem:[%s2 + $0x30] sm:$0xff] %vm654, %v366
  %662 = vst.msk [vmem:[%s2 + $0x38] sm:$0xff] %vm654, %v371
  %663 = vst.msk [vmem:[%s2 + $0x40] sm:$0xff] %vm654, %v376
  %664 = vst.msk [vmem:[%s2 + $0x48] sm:$0xff] %vm654, %v381
  %665 = vst.msk [vmem:[%s2 + $0x50] sm:$0xff] %vm654, %v386
  %666 = vst.msk [vmem:[%s2 + $0x58] sm:$0xff] %vm654, %v391
  %667 = vst.msk [vmem:[%s2 + $0x60] sm:$0xff] %vm654, %v396
  %668 = vst.msk [vmem:[%s2 + $0x68] sm:$0xff] %vm654, %v401
  %669 = vst.msk [vmem:[%s2 + $0x70] sm:$0xff] %vm654, %v406
  %670 = vst.msk [vmem:[%s2 + $0x78] sm:$0xff] %vm654, %v411
  %671 = vst.msk [vmem:[%s2 + $0x80] sm:$0xff] %vm654, %v416
  %672 = vst.msk [vmem:[%s2 + $0x88] sm:$0xff] %vm654, %v421
  %673 = vst.msk [vmem:[%s2 + $0x90] sm:$0xff] %vm654, %v426
  %674 = vst.msk [vmem:[%s2 + $0x98] sm:$0xff] %vm654, %v431
  %675 = vst.msk [vmem:[%s2 + $0xa0] sm:$0xff] %vm654, %v436
  %676 = vst.msk [vmem:[%s2 + $0xa8] sm:$0xff] %vm654, %v441
  %677 = vst.msk [vmem:[%s2 + $0xb0] sm:$0xff] %vm654, %v446
  %678 = vst.msk [vmem:[%s2 + $0xb8] sm:$0xff] %vm654, %v451
  %679 = vst.msk [vmem:[%s2 + $0xc0] sm:$0xff] %vm654, %v456
  %680 = vst.msk [vmem:[%s2 + $0xc8] sm:$0xff] %vm654, %v461
  %681 = vst.msk [vmem:[%s2 + $0xd0] sm:$0xff] %vm654, %v466
  %682 = vst.msk [vmem:[%s2 + $0xd8] sm:$0xff] %vm654, %v471
  %683 = vst.msk [vmem:[%s2 + $0xe0] sm:$0xff] %vm654, %v476
  %684 = vst.msk [vmem:[%s2 + $0xe8] sm:$0xff] %vm654, %v481
  %685 = vst.msk [vmem:[%s2 + $0xf0] sm:$0xff] %vm654, %v486
  %686 = vst.msk [vmem:[%s2 + $0xf8] sm:$0xff] %vm654, %v491
  %687 = vst.msk [vmem:[%s2 + $0x100] sm:$0xff] %vm654, %v496
  %688 = vst.msk [vmem:[%s2 + $0x108] sm:$0xff] %vm654, %v501
  %689 = vst.msk [vmem:[%s2 + $0x110] sm:$0xff] %vm654, %v506
  %690 = vst.msk [vmem:[%s2 + $0x118] sm:$0xff] %vm654, %v511
  %691 = vst.msk [vmem:[%s2 + $0x120] sm:$0xff] %vm654, %v516
  %692 = vst.msk [vmem:[%s2 + $0x128] sm:$0xff] %vm654, %v521
  %693 = vst.msk [vmem:[%s2 + $0x130] sm:$0xff] %vm654, %v526
  %694 = vst.msk [vmem:[%s2 + $0x138] sm:$0xff] %vm654, %v531
  %695 = vst.msk [vmem:[%s2 + $0x140] sm:$0xff] %vm654, %v536
  %696 = vst.msk [vmem:[%s2 + $0x148] sm:$0xff] %vm654, %v541
  %697 = vst.msk [vmem:[%s2 + $0x150] sm:$0xff] %vm654, %v546
  %698 = vst.msk [vmem:[%s2 + $0x158] sm:$0xff] %vm654, %v551
  %699 = vst.msk [vmem:[%s2 + $0x160] sm:$0xff] %vm654, %v556
  %700 = vst.msk [vmem:[%s2 + $0x168] sm:$0xff] %vm654, %v561
  %701 = vst.msk [vmem:[%s2 + $0x170] sm:$0xff] %vm654, %v566
  %702 = vst.msk [vmem:[%s2 + $0x178] sm:$0xff] %vm654, %v571
  %703 = vst.msk [vmem:[%s2 + $0x180] sm:$0xff] %vm654, %v576
  %704 = vst.msk [vmem:[%s2 + $0x188] sm:$0xff] %vm654, %v581
  %705 = vst.msk [vmem:[%s2 + $0x190] sm:$0xff] %vm654, %v586
  %706 = vst.msk [vmem:[%s2 + $0x198] sm:$0xff] %vm654, %v591
  %707 = vst.msk [vmem:[%s2 + $0x1a0] sm:$0xff] %vm654, %v596
  %708 = vst.msk [vmem:[%s2 + $0x1a8] sm:$0xff] %vm654, %v601
  %709 = vst.msk [vmem:[%s2 + $0x1b0] sm:$0xff] %vm654, %v606
  %710 = vst.msk [vmem:[%s2 + $0x1b8] sm:$0xff] %vm654, %v611
  %711 = vst.msk [vmem:[%s2 + $0x1c0] sm:$0xff] %vm654, %v616
  %712 = vst.msk [vmem:[%s2 + $0x1c8] sm:$0xff] %vm654, %v621
  %713 = vst.msk [vmem:[%s2 + $0x1d0] sm:$0xff] %vm654, %v626
  %714 = vst.msk [vmem:[%s2 + $0x1d8] sm:$0xff] %vm654, %v631
  %715 = vst.msk [vmem:[%s2 + $0x1e0] sm:$0xff] %vm654, %v636
  %716 = vst.msk [vmem:[%s2 + $0x1e8] sm:$0xff] %vm654, %v641
  %717 = vst.msk [vmem:[%s2 + $0x1f0] sm:$0xff] %vm654, %v646
  %718 = vst.msk [vmem:[%s2 + $0x1f8] sm:$0xff] %vm654, %v651
  // Predicated region
  $region10: #{tpu_custom_call.1} parent=0 // pred_check
    _
  $region11: #{tpu_custom_call.1} parent=0 // pred_check_branch
    %720 = sbr.rel (0) target = $region13
  $region12: #{tpu_custom_call.1} parent=0 // pred_region
    _
  $region13: #{tpu_custom_call.1} parent=0 // pred_fallthru
    _
  // Predicated region
  $region14: #{tpu_custom_call.1} parent=0 // pred_check
    _
  $region15: #{tpu_custom_call.1} parent=0 // pred_check_branch
    %722 = sbr.rel (0) target = $region17
  $region16: #{tpu_custom_call.1} parent=0 // pred_region
    _
  $region17: #{tpu_custom_call.1} parent=0 // pred_fallthru
    _

</llo_original>
